<compile_context>
chip_gen: v7x
topology: tpu7x:2x2x1
jax: 0.10.0
libtpu: 0.0.40
codegen_flags: <defaults>
</compile_context>

<pallas_src>
import math

import jax
import jax.numpy as jnp
from jax.experimental import pallas as pl
from jax.experimental.pallas import tpu as pltpu

_LANE = 128


def _round_up(x, m):
    return ((x + m - 1) // m) * m


def _make_kernel(sl1_meta, bce_meta, block_rows):
    """sl1_meta: [(start, end, beta, w_per_elem)]; bce_meta: [(start, end, pos_weight, w_per_elem)]."""

    def kernel(sl1_p_ref, sl1_t_ref, bce_p_ref, bce_t_ref, out_ref):
        i = pl.program_id(0)

        @pl.when(i == 0)
        def _init():
            out_ref[...] = jnp.zeros_like(out_ref)

        shape = (block_rows, _LANE)
        row = jax.lax.broadcasted_iota(jnp.int32, shape, 0) + i * block_rows
        col = jax.lax.broadcasted_iota(jnp.int32, shape, 1)
        idx = row * _LANE + col  # global flat element index within each slab

        # ---- SmoothL1 heads: boxes (beta=0.1, w=7.5), angle (beta=0.05, w=1.0) ----
        p = sl1_p_ref[...].astype(jnp.float32)
        t = sl1_t_ref[...].astype(jnp.float32)
        d = jnp.abs(p - t)
        w = jnp.zeros(shape, jnp.float32)
        beta = jnp.ones(shape, jnp.float32)            # dummy beta=1 on padding
        half_over_beta = jnp.zeros(shape, jnp.float32)
        half_beta = jnp.zeros(shape, jnp.float32)
        for (s, e, b, wt) in sl1_meta:
            m = (idx >= s) & (idx < e)
            w = jnp.where(m, jnp.float32(wt), w)
            beta = jnp.where(m, jnp.float32(b), beta)
            half_over_beta = jnp.where(m, jnp.float32(0.5 / b), half_over_beta)
            half_beta = jnp.where(m, jnp.float32(0.5 * b), half_beta)
        sl1 = jnp.where(d < beta, d * d * half_over_beta, d - half_beta)
        part = jnp.sum(sl1 * w, keepdims=True)          # (1, 1)

        # ---- BCE heads: cls (pw=1.5,w=0.5), text (pw=2,w=1.5), angle_conf (w=0.5), conf (w=1) ----
        x = bce_p_ref[...].astype(jnp.float32)
        y = bce_t_ref[...].astype(jnp.float32)
        w2 = jnp.zeros(shape, jnp.float32)
        pwm1 = jnp.zeros(shape, jnp.float32)            # pos_weight - 1
        for (s, e, pw, wt) in bce_meta:
            m = (idx >= s) & (idx < e)
            w2 = jnp.where(m, jnp.float32(wt), w2)
            pwm1 = jnp.where(m, jnp.float32(pw - 1.0), pwm1)
        # One softplus per element: softplus(-x) = relu(-x) + log1p(exp(-|x|))
        sp_neg = jnp.maximum(-x, 0.0) + jnp.log1p(jnp.exp(-jnp.abs(x)))
        bce = (1.0 - y) * x + (1.0 + pwm1 * y) * sp_neg
        part = part + jnp.sum(bce * w2, keepdims=True)  # (1, 1)

        out_ref[...] = out_ref[...] + part

    return kernel


def custom_loss(pred_boxes, pred_cls, pred_text, pred_angle, pred_angle_conf,
                pred_conf, target_boxes, target_cls, target_text, target_angle,
                target_conf, *, max_block_rows=512):
    """total = 7.5*SmoothL1(boxes,0.1) + 0.5*BCE(cls,pw=1.5) + 1.5*BCE(text,pw=2)
             + 1.0*SmoothL1(angle,0.05) + 0.5*BCE(angle_conf) + 1.0*BCE(conf)."""
    # (pred, target, beta, loss_weight)
    sl1_heads = [
        (pred_boxes, target_boxes, 0.1, 7.5),
        (pred_angle, target_angle, 0.05, 1.0),
    ]
    # (logits, target, pos_weight, loss_weight)
    bce_heads = [
        (pred_cls, target_cls, 1.5, 0.5),
        (pred_text, target_text, 2.0, 1.5),
        (pred_angle_conf, target_conf, 1.0, 0.5),
        (pred_conf, target_conf, 1.0, 1.0),
    ]

    def meta(heads):
        out, off = [], 0
        for (p, _t, prm, lw) in heads:
            n = max(1, math.prod(p.shape))
            out.append((off, off + n, float(prm), float(lw) / float(n)))
            off += n
        return out, off

    sl1_meta, sl1_n = meta(sl1_heads)
    bce_meta, bce_n = meta(bce_heads)

    rows = max(pl.cdiv(sl1_n, _LANE), pl.cdiv(bce_n, _LANE))
    block_rows = _round_up(min(max_block_rows, _round_up(rows, 8)), 8)
    rows_pad = _round_up(rows, block_rows)
    grid = (rows_pad // block_rows,)

    def pack(pieces):
        # Keep native dtype (bf16 stays bf16 in HBM); upcast happens in-kernel.
        dt = jnp.result_type(*[a.dtype for a in pieces])
        flat = jnp.concatenate([jnp.reshape(a.astype(dt), (-1,)) for a in pieces])
        flat = jnp.pad(flat, (0, rows_pad * _LANE - flat.shape[0]))
        return jnp.reshape(flat, (rows_pad, _LANE))

    sl1_p = pack([h[0] for h in sl1_heads])
    sl1_t = pack([h[1] for h in sl1_heads])
    bce_p = pack([h[0] for h in bce_heads])
    bce_t = pack([h[1] for h in bce_heads])

    block = (block_rows, _LANE)
    out = pl.pallas_call(
        _make_kernel(sl1_meta, bce_meta, block_rows),
        out_shape=jax.ShapeDtypeStruct((1, 1), jnp.float32),
        grid=grid,
        in_specs=[pl.BlockSpec(block, lambda i: (i, 0))] * 4,
        out_specs=pl.BlockSpec((1, 1), lambda i: (0, 0)),
        compiler_params=pltpu.CompilerParams(
            dimension_semantics=("arbitrary",)),
    )(sl1_p, sl1_t, bce_p, bce_t)
    return out[0, 0]


# ----------------------------- pure-JAX reference -----------------------------
def _softplus(x):
    return jnp.maximum(x, 0.0) + jnp.log1p(jnp.exp(-jnp.abs(x)))


def _bce_ref(x, y, pw):
    return jnp.mean(pw * y * _softplus(-x) + (1.0 - y) * _softplus(x))


def _sl1_ref(p, t, beta):
    d = jnp.abs(p - t)
    return jnp.mean(jnp.where(d < beta, 0.5 * d * d / beta, d - 0.5 * beta))


def _reference_loss(pred_boxes, pred_cls, pred_text, pred_angle, pred_angle_conf,
                    pred_conf, target_boxes, target_cls, target_text, target_angle,
                    target_conf):
    box = _sl1_ref(pred_boxes, target_boxes, 0.1)
    cls = _bce_ref(pred_cls, target_cls, 1.5)
    txt = _bce_ref(pred_text, target_text, 2.0)
    ang = _sl1_ref(pred_angle, target_angle, 0.05)
    ang_conf = _bce_ref(pred_angle_conf, target_conf, 1.0)
    conf = _bce_ref(pred_conf, target_conf, 1.0)
    return (7.5 * box + 0.5 * cls + 1.5 * txt + 1.0 * ang
            + 0.5 * ang_conf + 1.0 * conf)


def _make_inputs(key, B, N, NUM_CLS):
    ks = jax.random.split(key, 11)
    pred_boxes = jax.random.normal(ks[0], (B, N, 4), jnp.float32)
    pred_cls = jax.random.normal(ks[1], (B, N, NUM_CLS), jnp.float32)
    pred_text = jax.random.normal(ks[2], (B, N, 1), jnp.float32)
    pred_angle = jax.random.normal(ks[3], (B, N, 1), jnp.float32)
    pred_angle_conf = jax.random.normal(ks[4], (B, N, 1), jnp.float32)
    pred_conf = jax.random.normal(ks[5], (B, N, 1), jnp.float32)
    target_boxes = jax.random.normal(ks[6], (B, N, 4), jnp.float32)
    target_cls = jax.random.bernoulli(ks[7], 0.3, (B, N, NUM_CLS)).astype(jnp.float32)
    target_text = jax.random.bernoulli(ks[8], 0.5, (B, N, 1)).astype(jnp.float32)
    target_angle = jax.random.normal(ks[9], (B, N, 1), jnp.float32)
    target_conf = jax.random.bernoulli(ks[10], 0.5, (B, N, 1)).astype(jnp.float32)
    return (pred_boxes, pred_cls, pred_text, pred_angle, pred_angle_conf, pred_conf,
            target_boxes, target_cls, target_text, target_angle, target_conf)


if __name__ == "__main__":
    key = jax.random.PRNGKey(0)
    k1, k2 = jax.random.split(key)

    # 1) tiny shapes (single grid step)
    args = _make_inputs(k1, B=2, N=8, NUM_CLS=12)
    total = custom_loss(*args)
    jax.block_until_ready(total)
    ref = _reference_loss(*args)
    assert jnp.allclose(total, ref, rtol=2e-5, atol=2e-5), (total, ref)

    # 2) slightly larger shapes with a small block to exercise multi-step grid
    #    accumulation (grid > 1).
    args2 = _make_inputs(k2, B=2, N=512, NUM_CLS=12)
    total2 = custom_loss(*args2, max_block_rows=64)
    jax.block_until_ready(total2)
    ref2 = _reference_loss(*args2)
    assert jnp.allclose(total2, ref2, rtol=2e-5, atol=2e-5), (total2, ref2)

    print("KERNEL_OK")
</pallas_src>

<mosaic_0001>
module attributes {stable_mosaic.version = 11 : i64} {
  func.func @kernel(%arg0: i32, %arg1: memref<8x128xf32, #tpu.memory_space<vmem>>, %arg2: memref<8x128xf32, #tpu.memory_space<vmem>>, %arg3: memref<8x128xf32, #tpu.memory_space<vmem>>, %arg4: memref<8x128xf32, #tpu.memory_space<vmem>>, %arg5: memref<1x1xf32, #tpu.memory_space<vmem>>) attributes {dimension_semantics = [#tpu.dimension_semantics<arbitrary>], iteration_bounds = array<i64: 1>, scalar_prefetch = 0 : i64, scratch_operands = 0 : i64, tpu.core_type = #tpu.core_type<tc>, window_params = [{transform_indices = @transform_0, window_bounds = array<i64: 8, 128>}, {transform_indices = @transform_1, window_bounds = array<i64: 8, 128>}, {transform_indices = @transform_2, window_bounds = array<i64: 8, 128>}, {transform_indices = @transform_3, window_bounds = array<i64: 8, 128>}, {pipeline_mode = #tpu.pipeline_mode<synchronous>, transform_indices = @transform_4, window_bounds = array<i64: 1, 1>}]} {
    %c0_i32 = arith.constant 0 : i32
    %0 = arith.cmpi eq, %arg0, %c0_i32 : i32
    %1 = arith.extui %0 : i1 to i32
    %c0_i32_0 = arith.constant 0 : i32
    %2 = arith.cmpi ne, %1, %c0_i32_0 : i32
    scf.if %2 {
      %cst_46 = arith.constant 0.000000e+00 : f32
      %124 = vector.broadcast %cst_46 : f32 to vector<1x1xf32>
      %c0_47 = arith.constant 0 : index
      %c0_48 = arith.constant 0 : index
      %125 = vector.load %arg5[%c0_47, %c0_48] : memref<1x1xf32, #tpu.memory_space<vmem>>, vector<1x1xf32>
      tpu.vector_store %arg5[%c0_47, %c0_48], %124 {strides = array<i32>} : memref<1x1xf32, #tpu.memory_space<vmem>>, vector<1x1xf32>,
    } else {
    }
    %3 = tpu.iota {dimensions = array<i32: 0>} : vector<8x128xi32>
    %c8_i32 = arith.constant 8 : i32
    %4 = arith.muli %arg0, %c8_i32 : i32
    %5 = vector.broadcast %4 : i32 to vector<8x128xi32>
    %6 = arith.addi %3, %5 : vector<8x128xi32>
    %7 = tpu.iota {dimensions = array<i32: 1>} : vector<8x128xi32>
    %c128_i32 = arith.constant 128 : i32
    %8 = vector.broadcast %c128_i32 : i32 to vector<8x128xi32>
    %9 = arith.muli %6, %8 : vector<8x128xi32>
    %10 = arith.addi %9, %7 : vector<8x128xi32>
    %c0 = arith.constant 0 : index
    %c0_1 = arith.constant 0 : index
    %11 = vector.load %arg1[%c0, %c0_1] : memref<8x128xf32, #tpu.memory_space<vmem>>, vector<8x128xf32>
    %c0_2 = arith.constant 0 : index
    %c0_3 = arith.constant 0 : index
    %12 = vector.load %arg2[%c0_2, %c0_3] : memref<8x128xf32, #tpu.memory_space<vmem>>, vector<8x128xf32>
    %13 = arith.subf %11, %12 : vector<8x128xf32>
    %14 = math.absf %13 : vector<8x128xf32>
    %cst = arith.constant 0.000000e+00 : f32
    %15 = vector.broadcast %cst : f32 to vector<8x128xf32>
    %cst_4 = arith.constant 1.000000e+00 : f32
    %16 = vector.broadcast %cst_4 : f32 to vector<8x128xf32>
    %cst_5 = arith.constant 0.000000e+00 : f32
    %17 = vector.broadcast %cst_5 : f32 to vector<8x128xf32>
    %cst_6 = arith.constant 0.000000e+00 : f32
    %18 = vector.broadcast %cst_6 : f32 to vector<8x128xf32>
    %c0_i32_7 = arith.constant 0 : i32
    %19 = vector.broadcast %c0_i32_7 : i32 to vector<8x128xi32>
    %20 = arith.cmpi sge, %10, %19 : vector<8x128xi32>
    %c64_i32 = arith.constant 64 : i32
    %21 = vector.broadcast %c64_i32 : i32 to vector<8x128xi32>
    %22 = arith.cmpi slt, %10, %21 : vector<8x128xi32>
    %23 = arith.andi %20, %22 : vector<8x128xi1>
    %cst_8 = arith.constant 0.1171875 : f32
    %24 = vector.broadcast %cst_8 : f32 to vector<8x128xf32>
    %25 = arith.select %23, %24, %15 : vector<8x128xi1>, vector<8x128xf32>
    %cst_9 = arith.constant 1.000000e-01 : f32
    %26 = vector.broadcast %cst_9 : f32 to vector<8x128xf32>
    %27 = arith.select %23, %26, %16 : vector<8x128xi1>, vector<8x128xf32>
    %cst_10 = arith.constant 5.000000e+00 : f32
    %28 = vector.broadcast %cst_10 : f32 to vector<8x128xf32>
    %29 = arith.select %23, %28, %17 : vector<8x128xi1>, vector<8x128xf32>
    %cst_11 = arith.constant 5.000000e-02 : f32
    %30 = vector.broadcast %cst_11 : f32 to vector<8x128xf32>
    %31 = arith.select %23, %30, %18 : vector<8x128xi1>, vector<8x128xf32>
    %c64_i32_12 = arith.constant 64 : i32
    %32 = vector.broadcast %c64_i32_12 : i32 to vector<8x128xi32>
    %33 = arith.cmpi sge, %10, %32 : vector<8x128xi32>
    %c80_i32 = arith.constant 80 : i32
    %34 = vector.broadcast %c80_i32 : i32 to vector<8x128xi32>
    %35 = arith.cmpi slt, %10, %34 : vector<8x128xi32>
    %36 = arith.andi %33, %35 : vector<8x128xi1>
    %cst_13 = arith.constant 6.250000e-02 : f32
    %37 = vector.broadcast %cst_13 : f32 to vector<8x128xf32>
    %38 = arith.select %36, %37, %25 : vector<8x128xi1>, vector<8x128xf32>
    %cst_14 = arith.constant 5.000000e-02 : f32
    %39 = vector.broadcast %cst_14 : f32 to vector<8x128xf32>
    %40 = arith.select %36, %39, %27 : vector<8x128xi1>, vector<8x128xf32>
    %cst_15 = arith.constant 1.000000e+01 : f32
    %41 = vector.broadcast %cst_15 : f32 to vector<8x128xf32>
    %42 = arith.select %36, %41, %29 : vector<8x128xi1>, vector<8x128xf32>
    %cst_16 = arith.constant 2.500000e-02 : f32
    %43 = vector.broadcast %cst_16 : f32 to vector<8x128xf32>
    %44 = arith.select %36, %43, %31 : vector<8x128xi1>, vector<8x128xf32>
    %45 = arith.cmpf olt, %14, %40 : vector<8x128xf32>
    %46 = arith.mulf %14, %14 : vector<8x128xf32>
    %47 = arith.mulf %46, %42 : vector<8x128xf32>
    %48 = arith.subf %14, %44 : vector<8x128xf32>
    %49 = arith.select %45, %47, %48 : vector<8x128xi1>, vector<8x128xf32>
    %50 = arith.mulf %49, %38 : vector<8x128xf32>
    %51 = vector.shape_cast %50 : vector<8x128xf32> to vector<1x8x128xf32>
    %cst_17 = arith.constant dense<0.000000e+00> : vector<1xf32>
    %52 = vector.multi_reduction <add>, %51, %cst_17 [1, 2] : vector<1x8x128xf32> to vector<1xf32>
    %53 = vector.shape_cast %52 : vector<1xf32> to vector<1x1x1xf32>
    %54 = vector.extract %53[0, 0, 0] : f32 from vector<1x1x1xf32>
    %55 = vector.broadcast %54 : f32 to vector<1x1xf32>
    %c0_18 = arith.constant 0 : index
    %c0_19 = arith.constant 0 : index
    %56 = vector.load %arg3[%c0_18, %c0_19] : memref<8x128xf32, #tpu.memory_space<vmem>>, vector<8x128xf32>
    %c0_20 = arith.constant 0 : index
    %c0_21 = arith.constant 0 : index
    %57 = vector.load %arg4[%c0_20, %c0_21] : memref<8x128xf32, #tpu.memory_space<vmem>>, vector<8x128xf32>
    %cst_22 = arith.constant 0.000000e+00 : f32
    %58 = vector.broadcast %cst_22 : f32 to vector<8x128xf32>
    %cst_23 = arith.constant 0.000000e+00 : f32
    %59 = vector.broadcast %cst_23 : f32 to vector<8x128xf32>
    %c0_i32_24 = arith.constant 0 : i32
    %60 = vector.broadcast %c0_i32_24 : i32 to vector<8x128xi32>
    %61 = arith.cmpi sge, %10, %60 : vector<8x128xi32>
    %c192_i32 = arith.constant 192 : i32
    %62 = vector.broadcast %c192_i32 : i32 to vector<8x128xi32>
    %63 = arith.cmpi slt, %10, %62 : vector<8x128xi32>
    %64 = arith.andi %61, %63 : vector<8x128xi1>
    %cst_25 = arith.constant 0.00260416674 : f32
    %65 = vector.broadcast %cst_25 : f32 to vector<8x128xf32>
    %66 = arith.select %64, %65, %58 : vector<8x128xi1>, vector<8x128xf32>
    %cst_26 = arith.constant 5.000000e-01 : f32
    %67 = vector.broadcast %cst_26 : f32 to vector<8x128xf32>
    %68 = arith.select %64, %67, %59 : vector<8x128xi1>, vector<8x128xf32>
    %c192_i32_27 = arith.constant 192 : i32
    %69 = vector.broadcast %c192_i32_27 : i32 to vector<8x128xi32>
    %70 = arith.cmpi sge, %10, %69 : vector<8x128xi32>
    %c208_i32 = arith.constant 208 : i32
    %71 = vector.broadcast %c208_i32 : i32 to vector<8x128xi32>
    %72 = arith.cmpi slt, %10, %71 : vector<8x128xi32>
    %73 = arith.andi %70, %72 : vector<8x128xi1>
    %cst_28 = arith.constant 9.375000e-02 : f32
    %74 = vector.broadcast %cst_28 : f32 to vector<8x128xf32>
    %75 = arith.select %73, %74, %66 : vector<8x128xi1>, vector<8x128xf32>
    %cst_29 = arith.constant 1.000000e+00 : f32
    %76 = vector.broadcast %cst_29 : f32 to vector<8x128xf32>
    %77 = arith.select %73, %76, %68 : vector<8x128xi1>, vector<8x128xf32>
    %c208_i32_30 = arith.constant 208 : i32
    %78 = vector.broadcast %c208_i32_30 : i32 to vector<8x128xi32>
    %79 = arith.cmpi sge, %10, %78 : vector<8x128xi32>
    %c224_i32 = arith.constant 224 : i32
    %80 = vector.broadcast %c224_i32 : i32 to vector<8x128xi32>
    %81 = arith.cmpi slt, %10, %80 : vector<8x128xi32>
    %82 = arith.andi %79, %81 : vector<8x128xi1>
    %cst_31 = arith.constant 3.125000e-02 : f32
    %83 = vector.broadcast %cst_31 : f32 to vector<8x128xf32>
    %84 = arith.select %82, %83, %75 : vector<8x128xi1>, vector<8x128xf32>
    %cst_32 = arith.constant 0.000000e+00 : f32
    %85 = vector.broadcast %cst_32 : f32 to vector<8x128xf32>
    %86 = arith.select %82, %85, %77 : vector<8x128xi1>, vector<8x128xf32>
    %c224_i32_33 = arith.constant 224 : i32
    %87 = vector.broadcast %c224_i32_33 : i32 to vector<8x128xi32>
    %88 = arith.cmpi sge, %10, %87 : vector<8x128xi32>
    %c240_i32 = arith.constant 240 : i32
    %89 = vector.broadcast %c240_i32 : i32 to vector<8x128xi32>
    %90 = arith.cmpi slt, %10, %89 : vector<8x128xi32>
    %91 = arith.andi %88, %90 : vector<8x128xi1>
    %cst_34 = arith.constant 6.250000e-02 : f32
    %92 = vector.broadcast %cst_34 : f32 to vector<8x128xf32>
    %93 = arith.select %91, %92, %84 : vector<8x128xi1>, vector<8x128xf32>
    %cst_35 = arith.constant 0.000000e+00 : f32
    %94 = vector.broadcast %cst_35 : f32 to vector<8x128xf32>
    %95 = arith.select %91, %94, %86 : vector<8x128xi1>, vector<8x128xf32>
    %cst_36 = arith.constant 0.000000e+00 : f32
    %96 = vector.broadcast %cst_36 : f32 to vector<8x128xf32>
    %97 = arith.subf %96, %56 : vector<8x128xf32>
    %cst_37 = arith.constant 0.000000e+00 : f32
    %98 = vector.broadcast %cst_37 : f32 to vector<8x128xf32>
    %99 = arith.maximumf %97, %98 : vector<8x128xf32>
    %100 = math.absf %56 : vector<8x128xf32>
    %cst_38 = arith.constant 0.000000e+00 : f32
    %101 = vector.broadcast %cst_38 : f32 to vector<8x128xf32>
    %102 = arith.subf %101, %100 : vector<8x128xf32>
    %103 = math.exp %102 : vector<8x128xf32>
    %104 = math.log1p %103 : vector<8x128xf32>
    %105 = arith.addf %99, %104 : vector<8x128xf32>
    %cst_39 = arith.constant 1.000000e+00 : f32
    %106 = vector.broadcast %cst_39 : f32 to vector<8x128xf32>
    %107 = arith.subf %106, %57 : vector<8x128xf32>
    %108 = arith.mulf %107, %56 : vector<8x128xf32>
    %109 = arith.mulf %95, %57 : vector<8x128xf32>
    %cst_40 = arith.constant 1.000000e+00 : f32
    %110 = vector.broadcast %cst_40 : f32 to vector<8x128xf32>
    %111 = arith.addf %110, %109 : vector<8x128xf32>
    %112 = arith.mulf %111, %105 : vector<8x128xf32>
    %113 = arith.addf %108, %112 : vector<8x128xf32>
    %114 = arith.mulf %113, %93 : vector<8x128xf32>
    %115 = vector.shape_cast %114 : vector<8x128xf32> to vector<1x8x128xf32>
    %cst_41 = arith.constant dense<0.000000e+00> : vector<1xf32>
    %116 = vector.multi_reduction <add>, %115, %cst_41 [1, 2] : vector<1x8x128xf32> to vector<1xf32>
    %117 = vector.shape_cast %116 : vector<1xf32> to vector<1x1x1xf32>
    %118 = vector.extract %117[0, 0, 0] : f32 from vector<1x1x1xf32>
    %119 = vector.broadcast %118 : f32 to vector<1x1xf32>
    %120 = arith.addf %55, %119 : vector<1x1xf32>
    %c0_42 = arith.constant 0 : index
    %c0_43 = arith.constant 0 : index
    %121 = vector.load %arg5[%c0_42, %c0_43] : memref<1x1xf32, #tpu.memory_space<vmem>>, vector<1x1xf32>
    %122 = arith.addf %121, %120 : vector<1x1xf32>
    %c0_44 = arith.constant 0 : index
    %c0_45 = arith.constant 0 : index
    %123 = vector.load %arg5[%c0_44, %c0_45] : memref<1x1xf32, #tpu.memory_space<vmem>>, vector<1x1xf32>
    tpu.vector_store %arg5[%c0_44, %c0_45], %122 {strides = array<i32>} : memref<1x1xf32, #tpu.memory_space<vmem>>, vector<1x1xf32>,
    return
  }
  func.func @transform_0(%arg0: i32) -> (i32, i32) {
    %c0_i32 = arith.constant 0 : i32
    %c0_i32_0 = arith.constant 0 : i32
    return %arg0, %c0_i32 : i32, i32
  }
  func.func @transform_1(%arg0: i32) -> (i32, i32) {
    %c0_i32 = arith.constant 0 : i32
    %c0_i32_0 = arith.constant 0 : i32
    return %arg0, %c0_i32 : i32, i32
  }
  func.func @transform_2(%arg0: i32) -> (i32, i32) {
    %c0_i32 = arith.constant 0 : i32
    %c0_i32_0 = arith.constant 0 : i32
    return %arg0, %c0_i32 : i32, i32
  }
  func.func @transform_3(%arg0: i32) -> (i32, i32) {
    %c0_i32 = arith.constant 0 : i32
    %c0_i32_0 = arith.constant 0 : i32
    return %arg0, %c0_i32 : i32, i32
  }
  func.func @transform_4(%arg0: i32) -> (i32, i32) {
    %c0_i32 = arith.constant 0 : i32
    %c0_i32_0 = arith.constant 0 : i32
    %c0_i32_1 = arith.constant 0 : i32
    return %c0_i32, %c0_i32_0 : i32, i32
  }
}

</mosaic_0001>

<llo_original>
// kernel: tpu_custom_call.1
$region0: #{tpu_custom_call.1}
  #allocation0 [shape = 'u32[]', space=smem, size = 0x4, offset = 0x4, fixed_abs, tag = 'smem constant byte address 0x4 - core index']
  #allocation1 [shape = 'u32[144,128]{1,0:T(1,128)}', space=vmem, size = 0x12000, scoped, tag = 'internal scratch']
  %s0 = inlined_call_operand.hbm [shape: f32[8,128], index: 0, kind: input, shape index: {}]
  %s1 = inlined_call_operand.hbm [shape: f32[8,128], index: 1, kind: input, shape index: {}]
  %s2 = inlined_call_operand.hbm [shape: f32[8,128], index: 2, kind: input, shape index: {}]
  %s3 = inlined_call_operand.vmem [shape: f32[8,128], index: 3, kind: input, shape index: {}]
  %s4 = inlined_call_operand.hbm [shape: f32[1,1], index: 4, kind: output, shape index: {}]
  %s5 = sld [smem:[#allocation0]]
  $region42: #{tpu_custom_call.1} parent=0
    _
  %s7 = ssub.s32 1, %s5
  %s8 = scalar_select 0, %s7, %s5
  $region1: #{tpu_custom_call.1} parent=0
    #allocation2 [shape = 'u8[4096]{0}', space=vmem, size = 0x1000, scoped, tag = 'input window, operand 0, single buffered']
    #allocation3 [shape = 's32[1]{0}', space=sflag, size = 0x4, scoped, tag = 'scoped memory for tpu_custom_call.1']
    #allocation4 [shape = 's32[1]{0}', space=sflag, size = 0x4, scoped, tag = 'scoped memory for tpu_custom_call.1']
    #allocation5 [shape = 'u8[4096]{0}', space=vmem, size = 0x1000, scoped, tag = 'input window, operand 1, single buffered']
    #allocation6 [shape = 's32[1]{0}', space=sflag, size = 0x4, scoped, tag = 'scoped memory for tpu_custom_call.1']
    #allocation7 [shape = 'u8[4096]{0}', space=vmem, size = 0x1000, scoped, tag = 'input window, operand 2, single buffered']
    #allocation8 [shape = 'u8[512]{0}', space=vmem, size = 0x400, scoped, tag = 'output window, operand 0, single buffered']
    %9 = vsyncpa [#allocation3], 0
    %10 = vsyncpa [#allocation6], 0
    %11 = vsyncpa [#allocation4], 0
    // Predicated region
    $region2: #{tpu_custom_call.1} parent=1 // pred_check
      _
    $region3: #{tpu_custom_call.1} parent=1 // pred_check_branch
      %13 = sbr.rel (0) target = $region5
    $region4: #{tpu_custom_call.1} parent=1 // pred_region
      %s15 = ssub.s32 128, 128
      %16 = vsyncadd [#allocation3], %s15
      %s18 = sshll.u32 [#allocation2], 4
      %s19 = int_to_ptr.vmem [resolvable:$true] %s18
      %21 = dma.hbm_to_vmem [thread:$0]  %s0, 128, %s19, [#allocation3]
    $region5: #{tpu_custom_call.1} parent=1 // pred_fallthru
      _
    // Predicated region
    $region6: #{tpu_custom_call.1} parent=1 // pred_check
      _
    $region7: #{tpu_custom_call.1} parent=1 // pred_check_branch
      %23 = sbr.rel (0) target = $region9
    $region8: #{tpu_custom_call.1} parent=1 // pred_region
      %s25 = ssub.s32 128, 128
      %26 = vsyncadd [#allocation6], %s25
      %s28 = sshll.u32 [#allocation5], 4
      %s29 = int_to_ptr.vmem [resolvable:$true] %s28
      %31 = dma.hbm_to_vmem [thread:$0]  %s1, 128, %s29, [#allocation6]
    $region9: #{tpu_custom_call.1} parent=1 // pred_fallthru
      _
    // Predicated region
    $region10: #{tpu_custom_call.1} parent=1 // pred_check
      _
    $region11: #{tpu_custom_call.1} parent=1 // pred_check_branch
      %33 = sbr.rel (0) target = $region13
    $region12: #{tpu_custom_call.1} parent=1 // pred_region
      %s35 = ssub.s32 128, 128
      %36 = vsyncadd [#allocation6], %s35
      %s38 = sshll.u32 [#allocation7], 4
      %s39 = int_to_ptr.vmem [resolvable:$true] %s38
      %41 = dma.hbm_to_vmem [thread:$0]  %s2, 128, %s39, [#allocation6]
    $region13: #{tpu_custom_call.1} parent=1 // pred_fallthru
      _
    // Predicated region
    $region14: #{tpu_custom_call.1} parent=1 // pred_check
      _
    $region15: #{tpu_custom_call.1} parent=1 // pred_check_branch
      %43 = sbr.rel (0) target = $region17
    $region16: #{tpu_custom_call.1} parent=1 // pred_region
      _
    $region17: #{tpu_custom_call.1} parent=1 // pred_fallthru
      _
    // Predicated region
    $region18: #{tpu_custom_call.1} parent=1 // pred_check
      _
    $region19: #{tpu_custom_call.1} parent=1 // pred_check_branch
      %45 = sbr.rel (0) target = $region21
    $region20: #{tpu_custom_call.1} parent=1 // pred_region
      %46 = dma.done [#allocation3], 128
    $region21: #{tpu_custom_call.1} parent=1 // pred_fallthru
      _
    // Predicated region
    $region22: #{tpu_custom_call.1} parent=1 // pred_check
      _
    $region23: #{tpu_custom_call.1} parent=1 // pred_check_branch
      %48 = sbr.rel (0) target = $region25
    $region24: #{tpu_custom_call.1} parent=1 // pred_region
      %49 = dma.done [#allocation6], 128
    $region25: #{tpu_custom_call.1} parent=1 // pred_fallthru
      _
    // Predicated region
    $region26: #{tpu_custom_call.1} parent=1 // pred_check
      _
    $region27: #{tpu_custom_call.1} parent=1 // pred_check_branch
      %51 = sbr.rel (0) target = $region29
    $region28: #{tpu_custom_call.1} parent=1 // pred_region
      %52 = dma.done [#allocation6], 128
    $region29: #{tpu_custom_call.1} parent=1 // pred_fallthru
      _
    %p53 = scmp.eq.s32.totalorder 0, 0
    // Predicated region
    $region30: #{tpu_custom_call.1} parent=1 // pred_check
      %p54 = pneg %p53
    $region31: #{tpu_custom_call.1} parent=1 // pred_check_branch
      %56 = sbr.rel (%p54) target = $region33
    $region32: #{tpu_custom_call.1} parent=1 // pred_region
      %vm57 = vcmask 0
      %58 = vst.msk [vmem:[#allocation8] sm:$0x1] %vm57, 0.0
    $region33: #{tpu_custom_call.1} parent=1 // pred_fallthru
      _
    %v59 = vlaneseq
    %v60 = vshrl.u32 %v59, 7
    %s61 = smul.u32 0, 8
    %v62 = vstv %s61
    %v63 = vadd.s32 %v60, %v62
    %v64 = vlaneseq
    %v65 = vand.u32 %v64, 127
    %v66 = vmul.u32 %v63, 128
    %v67 = vadd.s32 %v66, %v65
    %v68 = vld [vmem:[#allocation2] sm:$0xff]
    %v69 = vld [vmem:[#allocation5] sm:$0xff]
    %v70 = vsub.f32 %v68, %v69
    %v71 = vand.u32 2147483647, %v70
    %vm72 = vcmp.ge.s32.totalorder %v67, 0
    %vm73 = vcmp.lt.s32.totalorder %v67, 64
    %vm74 = vmand %vm72, %vm73
    %v75 = vsel %vm74, 0.1171875, 0.0
    %v76 = vsel %vm74, 0.1, 1.0
    %v77 = vsel %vm74, 5.0, 0.0
    %v78 = vsel %vm74, 0.05, 0.0
    %vm79 = vcmp.ge.s32.totalorder %v67, 64
    %vm80 = vcmp.lt.s32.totalorder %v67, 80
    %vm81 = vmand %vm79, %vm80
    %v82 = vsel %vm81, 0.0625, %v75
    %v83 = vsel %vm81, 0.05, %v76
    %v84 = vsel %vm81, 10.0, %v77
    %v85 = vsel %vm81, 0.025, %v78
    %vm86 = vcmp.lt.f32.partialorder %v71, %v83
    %v87 = vmul.f32 %v71, %v71
    %v88 = vmul.f32 %v87, %v84
    %v89 = vsub.f32 %v71, %v85
    %v90 = vsel %vm86, %v88, %v89
    %v91 = vmul.f32 %v90, %v82
    %92 = vadd.xlane.f32.xlu0 %v91
    %v93 = vpop.xlane.xlu0 %92
    %v94 = vrot.slane %v93, 4
    %v95 = vadd.f32 %v93, %v94
    %v96 = vrot.slane %v95, 2
    %v97 = vadd.f32 %v95, %v96
    %v98 = vrot.slane %v97, 1
    %v99 = vadd.f32 %v97, %v98
    %s100 = vtos %v99
    %v101 = vstv %s100
    %v102 = vld [vmem:[#allocation7] sm:$0xff]
    %v103 = vld [vmem:[%s3] sm:$0xff]
    %vm104 = vcmp.lt.s32.totalorder %v67, 192
    %vm105 = vmand %vm72, %vm104
    %v106 = vsel %vm105, 0.0026041667, 0.0
    %v107 = vsel %vm105, 0.5, 0.0
    %vm108 = vcmp.ge.s32.totalorder %v67, 192
    %vm109 = vcmp.lt.s32.totalorder %v67, 208
    %vm110 = vmand %vm108, %vm109
    %v111 = vsel %vm110, 0.09375, %v106
    %v112 = vsel %vm110, 1.0, %v107
    %vm113 = vcmp.ge.s32.totalorder %v67, 208
    %vm114 = vcmp.lt.s32.totalorder %v67, 224
    %vm115 = vmand %vm113, %vm114
    %v116 = vsel %vm115, 0.03125, %v111
    %v117 = vsel %vm115, 0.0, %v112
    %vm118 = vcmp.ge.s32.totalorder %v67, 224
    %vm119 = vcmp.lt.s32.totalorder %v67, 240
    %vm120 = vmand %vm118, %vm119
    %v121 = vsel %vm120, 0.0625, %v116
    %v122 = vsel %vm120, 0.0, %v117
    %v123 = vsub.f32 0.0, %v102
    %v124 = vmax.f32 %v123, 0.0
    %v125 = vand.u32 2147483647, %v102
    %v126 = vsub.f32 0.0, %v125
    %v127 = vmul.f32 %v126, 1.442695
    %v128 = vpow.pop %v127
    %v129 = vadd.f32 %v128, 1.0
    %v130 = vlog2.pop %v129
    %v131 = vmul.f32 %v130, 0.6931472
    %v132 = vmul.f32 -0.5, %v128
    %v133 = vadd.f32 %v132, 1.0
    %v134 = vmul.f32 %v133, %v128
    %v135 = vand.u32 2147483647, %v128
    %vm136 = vcmp.lt.f32.partialorder %v135, 0.0004427343
    %v137 = vsel %vm136, %v134, %v131
    %v138 = vadd.f32 %v124, %v137
    %v139 = vsub.f32 1.0, %v103
    %v140 = vmul.f32 %v139, %v102
    %v141 = vmul.f32 %v122, %v103
    %v142 = vadd.f32 %v141, 1.0
    %v143 = vmul.f32 %v142, %v138
    %v144 = vadd.f32 %v140, %v143
    %v145 = vmul.f32 %v144, %v121
    %146 = vadd.xlane.f32.xlu0 %v145
    %v147 = vpop.xlane.xlu0 %146
    %v148 = vrot.slane %v147, 4
    %v149 = vadd.f32 %v147, %v148
    %v150 = vrot.slane %v149, 2
    %v151 = vadd.f32 %v149, %v150
    %v152 = vrot.slane %v151, 1
    %v153 = vadd.f32 %v151, %v152
    %s154 = vtos %v153
    %v155 = vstv %s154
    %v156 = vadd.f32 %v101, %v155
    %v157 = vld [vmem:[#allocation8] sm:$0x1]
    %v158 = vadd.f32 %v157, %v156
    %vm159 = vcmask 0
    %160 = vst.msk [vmem:[#allocation8] sm:$0x1] %vm159, %v158
    // Predicated region
    $region34: #{tpu_custom_call.1} parent=1 // pred_check
      _
    $region35: #{tpu_custom_call.1} parent=1 // pred_check_branch
      %162 = sbr.rel (0) target = $region37
    $region36: #{tpu_custom_call.1} parent=1 // pred_region
      %s164 = ssub.s32 16, 16
      %165 = vsyncadd [#allocation4], %s164
      %s167 = sshll.u32 [#allocation8], 4
      %s168 = int_to_ptr.vmem [resolvable:$true] %s167
      %170 = dma.vmem_to_hbm [thread:$0]  %s168, 16, %s4, [#allocation4]
    $region37: #{tpu_custom_call.1} parent=1 // pred_fallthru
      _
    // Predicated region
    $region38: #{tpu_custom_call.1} parent=1 // pred_check
      _
    $region39: #{tpu_custom_call.1} parent=1 // pred_check_branch
      %172 = sbr.rel (0) target = $region41
    $region40: #{tpu_custom_call.1} parent=1 // pred_region
      %173 = dma.done [#allocation4], 16
    $region41: #{tpu_custom_call.1} parent=1 // pred_fallthru
      _
    %174 = vsyncpa [#allocation3], 1
    %175 = vsyncpa [#allocation6], 1
    %176 = vsyncpa [#allocation4], 1

</llo_original>
